<compile_context>
chip_gen: v7x
topology: tpu7x:2x2x1
jax: 0.10.0
libtpu: 0.0.40
codegen_flags: <defaults>
</compile_context>

<pallas_src>
import jax
import jax.numpy as jnp
from jax.experimental import pallas as pl
from jax.experimental.pallas import tpu as pltpu


# Layer sizes of the PyTorch module.
D_IN, D_H1, D_H2, D_OUT = 8, 6, 3, 1

# Offsets inside the packed flat parameter slab (row-major weights, then bias).
_W1_OFF = 0
_B1_OFF = _W1_OFF + D_IN * D_H1        # 48
_W2_OFF = _B1_OFF + D_H1               # 54
_B2_OFF = _W2_OFF + D_H1 * D_H2        # 72
_W3_OFF = _B2_OFF + D_H2               # 75
_B3_OFF = _W3_OFF + D_H2 * D_OUT       # 78
_N_PARAMS = _B3_OFF + D_OUT            # 79
_P_PAD = 128                           # pad slab to a round size

_LANE = 128                            # lane width of the batch tiles


def _mlp_kernel(p_ref, x_ref, o_ref):
    # p_ref: SMEM (128,) f32  -- packed [W1, b1, W2, b2, W3, b3], resident.
    # x_ref: VMEM (8, Bs, 128) f32 -- feature-major, batch on (sublane, lane).
    # o_ref: VMEM (Bs, 128) f32    -- lane-dense output tile.

    # Layer 1: h1[j] = sigmoid(b1[j] + sum_k W1[k, j] * x[k])
    h1 = []
    for j in range(D_H1):
        acc = x_ref[0, :, :] * p_ref[_W1_OFF + j]
        for k in range(1, D_IN):
            acc = acc + x_ref[k, :, :] * p_ref[_W1_OFF + k * D_H1 + j]
        h1.append(jax.nn.sigmoid(acc + p_ref[_B1_OFF + j]))

    # Layer 2: h2[j] = sigmoid(b2[j] + sum_k W2[k, j] * h1[k])
    h2 = []
    for j in range(D_H2):
        acc = h1[0] * p_ref[_W2_OFF + j]
        for k in range(1, D_H1):
            acc = acc + h1[k] * p_ref[_W2_OFF + k * D_H2 + j]
        h2.append(jax.nn.sigmoid(acc + p_ref[_B2_OFF + j]))

    # Layer 3: y = sigmoid(b3 + sum_k W3[k] * h2[k])
    acc = h2[0] * p_ref[_W3_OFF + 0]
    for k in range(1, D_H2):
        acc = acc + h2[k] * p_ref[_W3_OFF + k]
    o_ref[...] = jax.nn.sigmoid(acc + p_ref[_B3_OFF])


def _round_up(n, m):
    return (n + m - 1) // m * m


def pack_params(params):
    """Pack (w1,b1,w2,b2,w3,b3) into one flat f32 slab for the SMEM operand."""
    w1, b1, w2, b2, w3, b3 = params
    flat = jnp.concatenate([
        w1.reshape(-1), b1.reshape(-1),
        w2.reshape(-1), b2.reshape(-1),
        w3.reshape(-1), b3.reshape(-1),
    ]).astype(jnp.float32)
    return jnp.pad(flat, (0, _P_PAD - _N_PARAMS))


def multi_layer_forward(x, params, *, max_batch_tile=32768):
    """x: (B, 8) f32 -> (B, 1) f32, identical semantics to the PyTorch module."""
    B = x.shape[0]
    assert x.shape[1] == D_IN

    flat = pack_params(params)

    # Batch tile: multiple of 8*128 = 1024, capped to keep VMEM footprint small
    # (fits the halved VMEM on v7x with headroom; raise for bigger v6e tiles).
    BT = min(max_batch_tile, _round_up(max(B, 1), 8 * _LANE))
    Bs = BT // _LANE                      # sublane rows per tile (multiple of 8)
    Bp = _round_up(B, BT)                 # padded batch
    G = Bp // BT                          # grid steps over the batch

    # Wrapper-side layout plumbing: pad, go feature-major, batch -> (rows, lanes).
    xp = jnp.pad(x.astype(jnp.float32), ((0, Bp - B), (0, 0)))
    xt = xp.T.reshape(D_IN, G * Bs, _LANE)

    out = pl.pallas_call(
        _mlp_kernel,
        grid=(G,),
        in_specs=[
            # Packed parameters: whole array in SMEM, resident across the grid.
            pl.BlockSpec(memory_space=pltpu.MemorySpace.SMEM),
            # Batch tile of the feature-major input.
            pl.BlockSpec((D_IN, Bs, _LANE), lambda g: (0, g, 0)),
        ],
        out_specs=pl.BlockSpec((Bs, _LANE), lambda g: (g, 0)),
        out_shape=jax.ShapeDtypeStruct((G * Bs, _LANE), jnp.float32),
        compiler_params=pltpu.CompilerParams(
            dimension_semantics=("parallel",),
        ),
    )(flat, xt)

    # Undo the layout plumbing: (G*Bs, 128) row-major == padded batch order.
    return out.reshape(Bp)[:B].reshape(B, 1)


def init_params(key):
    """Deterministic init mirroring torch.nn.Linear (weights stored as (in, out))."""
    def linear(key, fan_in, fan_out):
        kw, kb = jax.random.split(key)
        bound = 1.0 / jnp.sqrt(float(fan_in))
        w = jax.random.uniform(kw, (fan_in, fan_out), jnp.float32, -bound, bound)
        b = jax.random.uniform(kb, (1, fan_out), jnp.float32, -bound, bound)
        return w, b

    k1, k2, k3 = jax.random.split(key, 3)
    w1, b1 = linear(k1, D_IN, D_H1)
    w2, b2 = linear(k2, D_H1, D_H2)
    w3, b3 = linear(k3, D_H2, D_OUT)
    return (w1, b1, w2, b2, w3, b3)


def _reference(x, params):
    w1, b1, w2, b2, w3, b3 = params
    h1 = jax.nn.sigmoid(x @ w1 + b1)
    h2 = jax.nn.sigmoid(h1 @ w2 + b2)
    return jax.nn.sigmoid(h2 @ w3 + b3)


if __name__ == "__main__":
    key = jax.random.PRNGKey(0)
    kx, kx2, kp = jax.random.split(key, 3)

    params = init_params(kp)

    # Small batch (matches the module spec: features 8 -> 6 -> 3 -> 1).
    B = 8
    x = jax.random.normal(kx, (B, D_IN), dtype=jnp.float32)
    y = jax.block_until_ready(multi_layer_forward(x, params))
    y_ref = _reference(x, params)
    assert y.shape == (B, 1)
    assert jnp.allclose(y, y_ref, atol=1e-5, rtol=1e-5), float(
        jnp.max(jnp.abs(y - y_ref)))

    # Exercise padding + multi-step grid path (G > 1) with a small tile.
    B2 = 2600
    x2 = jax.random.normal(kx2, (B2, D_IN), dtype=jnp.float32)
    y2 = jax.block_until_ready(
        multi_layer_forward(x2, params, max_batch_tile=1024))
    y2_ref = _reference(x2, params)
    assert y2.shape == (B2, 1)
    assert jnp.allclose(y2, y2_ref, atol=1e-5, rtol=1e-5), float(
        jnp.max(jnp.abs(y2 - y2_ref)))

    print("KERNEL_OK")
</pallas_src>

<mosaic_0001>
module attributes {stable_mosaic.version = 11 : i64} {
  func.func @_mlp_kernel(%arg0: i32, %arg1: memref<128xf32, #tpu.memory_space<smem>>, %arg2: memref<8x8x128xf32, #tpu.memory_space<vmem>>, %arg3: memref<8x128xf32, #tpu.memory_space<vmem>>) attributes {dimension_semantics = [#tpu.dimension_semantics<parallel>], iteration_bounds = array<i64: 1>, scalar_prefetch = 0 : i64, scratch_operands = 0 : i64, tpu.core_type = #tpu.core_type<tc>, window_params = [{transform_indices = @transform_0, window_bounds = array<i64: 128>}, {transform_indices = @transform_1, window_bounds = array<i64: 8, 8, 128>}, {transform_indices = @transform_2, window_bounds = array<i64: 8, 128>}]} {
    %c0 = arith.constant 0 : index
    %c0_0 = arith.constant 0 : index
    %c0_1 = arith.constant 0 : index
    %0 = vector.load %arg2[%c0, %c0_0, %c0_1] : memref<8x8x128xf32, #tpu.memory_space<vmem>>, vector<1x8x128xf32>
    %1 = vector.shape_cast %0 : vector<1x8x128xf32> to vector<8x128xf32>
    %c0_2 = arith.constant 0 : index
    %2 = memref.load %arg1[%c0_2] : memref<128xf32, #tpu.memory_space<smem>>
    %3 = vector.broadcast %2 : f32 to vector<8x128xf32>
    %4 = arith.mulf %1, %3 : vector<8x128xf32>
    %c1 = arith.constant 1 : index
    %c0_3 = arith.constant 0 : index
    %c0_4 = arith.constant 0 : index
    %5 = vector.load %arg2[%c1, %c0_3, %c0_4] : memref<8x8x128xf32, #tpu.memory_space<vmem>>, vector<1x8x128xf32>
    %6 = vector.shape_cast %5 : vector<1x8x128xf32> to vector<8x128xf32>
    %c6 = arith.constant 6 : index
    %7 = memref.load %arg1[%c6] : memref<128xf32, #tpu.memory_space<smem>>
    %8 = vector.broadcast %7 : f32 to vector<8x128xf32>
    %9 = arith.mulf %6, %8 : vector<8x128xf32>
    %10 = arith.addf %4, %9 : vector<8x128xf32>
    %c2 = arith.constant 2 : index
    %c0_5 = arith.constant 0 : index
    %c0_6 = arith.constant 0 : index
    %11 = vector.load %arg2[%c2, %c0_5, %c0_6] : memref<8x8x128xf32, #tpu.memory_space<vmem>>, vector<1x8x128xf32>
    %12 = vector.shape_cast %11 : vector<1x8x128xf32> to vector<8x128xf32>
    %c12 = arith.constant 12 : index
    %13 = memref.load %arg1[%c12] : memref<128xf32, #tpu.memory_space<smem>>
    %14 = vector.broadcast %13 : f32 to vector<8x128xf32>
    %15 = arith.mulf %12, %14 : vector<8x128xf32>
    %16 = arith.addf %10, %15 : vector<8x128xf32>
    %c3 = arith.constant 3 : index
    %c0_7 = arith.constant 0 : index
    %c0_8 = arith.constant 0 : index
    %17 = vector.load %arg2[%c3, %c0_7, %c0_8] : memref<8x8x128xf32, #tpu.memory_space<vmem>>, vector<1x8x128xf32>
    %18 = vector.shape_cast %17 : vector<1x8x128xf32> to vector<8x128xf32>
    %c18 = arith.constant 18 : index
    %19 = memref.load %arg1[%c18] : memref<128xf32, #tpu.memory_space<smem>>
    %20 = vector.broadcast %19 : f32 to vector<8x128xf32>
    %21 = arith.mulf %18, %20 : vector<8x128xf32>
    %22 = arith.addf %16, %21 : vector<8x128xf32>
    %c4 = arith.constant 4 : index
    %c0_9 = arith.constant 0 : index
    %c0_10 = arith.constant 0 : index
    %23 = vector.load %arg2[%c4, %c0_9, %c0_10] : memref<8x8x128xf32, #tpu.memory_space<vmem>>, vector<1x8x128xf32>
    %24 = vector.shape_cast %23 : vector<1x8x128xf32> to vector<8x128xf32>
    %c24 = arith.constant 24 : index
    %25 = memref.load %arg1[%c24] : memref<128xf32, #tpu.memory_space<smem>>
    %26 = vector.broadcast %25 : f32 to vector<8x128xf32>
    %27 = arith.mulf %24, %26 : vector<8x128xf32>
    %28 = arith.addf %22, %27 : vector<8x128xf32>
    %c5 = arith.constant 5 : index
    %c0_11 = arith.constant 0 : index
    %c0_12 = arith.constant 0 : index
    %29 = vector.load %arg2[%c5, %c0_11, %c0_12] : memref<8x8x128xf32, #tpu.memory_space<vmem>>, vector<1x8x128xf32>
    %30 = vector.shape_cast %29 : vector<1x8x128xf32> to vector<8x128xf32>
    %c30 = arith.constant 30 : index
    %31 = memref.load %arg1[%c30] : memref<128xf32, #tpu.memory_space<smem>>
    %32 = vector.broadcast %31 : f32 to vector<8x128xf32>
    %33 = arith.mulf %30, %32 : vector<8x128xf32>
    %34 = arith.addf %28, %33 : vector<8x128xf32>
    %c6_13 = arith.constant 6 : index
    %c0_14 = arith.constant 0 : index
    %c0_15 = arith.constant 0 : index
    %35 = vector.load %arg2[%c6_13, %c0_14, %c0_15] : memref<8x8x128xf32, #tpu.memory_space<vmem>>, vector<1x8x128xf32>
    %36 = vector.shape_cast %35 : vector<1x8x128xf32> to vector<8x128xf32>
    %c36 = arith.constant 36 : index
    %37 = memref.load %arg1[%c36] : memref<128xf32, #tpu.memory_space<smem>>
    %38 = vector.broadcast %37 : f32 to vector<8x128xf32>
    %39 = arith.mulf %36, %38 : vector<8x128xf32>
    %40 = arith.addf %34, %39 : vector<8x128xf32>
    %c7 = arith.constant 7 : index
    %c0_16 = arith.constant 0 : index
    %c0_17 = arith.constant 0 : index
    %41 = vector.load %arg2[%c7, %c0_16, %c0_17] : memref<8x8x128xf32, #tpu.memory_space<vmem>>, vector<1x8x128xf32>
    %42 = vector.shape_cast %41 : vector<1x8x128xf32> to vector<8x128xf32>
    %c42 = arith.constant 42 : index
    %43 = memref.load %arg1[%c42] : memref<128xf32, #tpu.memory_space<smem>>
    %44 = vector.broadcast %43 : f32 to vector<8x128xf32>
    %45 = arith.mulf %42, %44 : vector<8x128xf32>
    %46 = arith.addf %40, %45 : vector<8x128xf32>
    %c48 = arith.constant 48 : index
    %47 = memref.load %arg1[%c48] : memref<128xf32, #tpu.memory_space<smem>>
    %48 = vector.broadcast %47 : f32 to vector<8x128xf32>
    %49 = arith.addf %46, %48 : vector<8x128xf32>
    %50 = arith.negf %49 : vector<8x128xf32>
    %51 = math.exp %50 : vector<8x128xf32>
    %cst = arith.constant 1.000000e+00 : f32
    %52 = vector.broadcast %cst : f32 to vector<8x128xf32>
    %53 = arith.addf %52, %51 : vector<8x128xf32>
    %54 = arith.divf %52, %53 : vector<8x128xf32>
    %c0_18 = arith.constant 0 : index
    %c0_19 = arith.constant 0 : index
    %c0_20 = arith.constant 0 : index
    %55 = vector.load %arg2[%c0_18, %c0_19, %c0_20] : memref<8x8x128xf32, #tpu.memory_space<vmem>>, vector<1x8x128xf32>
    %56 = vector.shape_cast %55 : vector<1x8x128xf32> to vector<8x128xf32>
    %c1_21 = arith.constant 1 : index
    %57 = memref.load %arg1[%c1_21] : memref<128xf32, #tpu.memory_space<smem>>
    %58 = vector.broadcast %57 : f32 to vector<8x128xf32>
    %59 = arith.mulf %56, %58 : vector<8x128xf32>
    %c1_22 = arith.constant 1 : index
    %c0_23 = arith.constant 0 : index
    %c0_24 = arith.constant 0 : index
    %60 = vector.load %arg2[%c1_22, %c0_23, %c0_24] : memref<8x8x128xf32, #tpu.memory_space<vmem>>, vector<1x8x128xf32>
    %61 = vector.shape_cast %60 : vector<1x8x128xf32> to vector<8x128xf32>
    %c7_25 = arith.constant 7 : index
    %62 = memref.load %arg1[%c7_25] : memref<128xf32, #tpu.memory_space<smem>>
    %63 = vector.broadcast %62 : f32 to vector<8x128xf32>
    %64 = arith.mulf %61, %63 : vector<8x128xf32>
    %65 = arith.addf %59, %64 : vector<8x128xf32>
    %c2_26 = arith.constant 2 : index
    %c0_27 = arith.constant 0 : index
    %c0_28 = arith.constant 0 : index
    %66 = vector.load %arg2[%c2_26, %c0_27, %c0_28] : memref<8x8x128xf32, #tpu.memory_space<vmem>>, vector<1x8x128xf32>
    %67 = vector.shape_cast %66 : vector<1x8x128xf32> to vector<8x128xf32>
    %c13 = arith.constant 13 : index
    %68 = memref.load %arg1[%c13] : memref<128xf32, #tpu.memory_space<smem>>
    %69 = vector.broadcast %68 : f32 to vector<8x128xf32>
    %70 = arith.mulf %67, %69 : vector<8x128xf32>
    %71 = arith.addf %65, %70 : vector<8x128xf32>
    %c3_29 = arith.constant 3 : index
    %c0_30 = arith.constant 0 : index
    %c0_31 = arith.constant 0 : index
    %72 = vector.load %arg2[%c3_29, %c0_30, %c0_31] : memref<8x8x128xf32, #tpu.memory_space<vmem>>, vector<1x8x128xf32>
    %73 = vector.shape_cast %72 : vector<1x8x128xf32> to vector<8x128xf32>
    %c19 = arith.constant 19 : index
    %74 = memref.load %arg1[%c19] : memref<128xf32, #tpu.memory_space<smem>>
    %75 = vector.broadcast %74 : f32 to vector<8x128xf32>
    %76 = arith.mulf %73, %75 : vector<8x128xf32>
    %77 = arith.addf %71, %76 : vector<8x128xf32>
    %c4_32 = arith.constant 4 : index
    %c0_33 = arith.constant 0 : index
    %c0_34 = arith.constant 0 : index
    %78 = vector.load %arg2[%c4_32, %c0_33, %c0_34] : memref<8x8x128xf32, #tpu.memory_space<vmem>>, vector<1x8x128xf32>
    %79 = vector.shape_cast %78 : vector<1x8x128xf32> to vector<8x128xf32>
    %c25 = arith.constant 25 : index
    %80 = memref.load %arg1[%c25] : memref<128xf32, #tpu.memory_space<smem>>
    %81 = vector.broadcast %80 : f32 to vector<8x128xf32>
    %82 = arith.mulf %79, %81 : vector<8x128xf32>
    %83 = arith.addf %77, %82 : vector<8x128xf32>
    %c5_35 = arith.constant 5 : index
    %c0_36 = arith.constant 0 : index
    %c0_37 = arith.constant 0 : index
    %84 = vector.load %arg2[%c5_35, %c0_36, %c0_37] : memref<8x8x128xf32, #tpu.memory_space<vmem>>, vector<1x8x128xf32>
    %85 = vector.shape_cast %84 : vector<1x8x128xf32> to vector<8x128xf32>
    %c31 = arith.constant 31 : index
    %86 = memref.load %arg1[%c31] : memref<128xf32, #tpu.memory_space<smem>>
    %87 = vector.broadcast %86 : f32 to vector<8x128xf32>
    %88 = arith.mulf %85, %87 : vector<8x128xf32>
    %89 = arith.addf %83, %88 : vector<8x128xf32>
    %c6_38 = arith.constant 6 : index
    %c0_39 = arith.constant 0 : index
    %c0_40 = arith.constant 0 : index
    %90 = vector.load %arg2[%c6_38, %c0_39, %c0_40] : memref<8x8x128xf32, #tpu.memory_space<vmem>>, vector<1x8x128xf32>
    %91 = vector.shape_cast %90 : vector<1x8x128xf32> to vector<8x128xf32>
    %c37 = arith.constant 37 : index
    %92 = memref.load %arg1[%c37] : memref<128xf32, #tpu.memory_space<smem>>
    %93 = vector.broadcast %92 : f32 to vector<8x128xf32>
    %94 = arith.mulf %91, %93 : vector<8x128xf32>
    %95 = arith.addf %89, %94 : vector<8x128xf32>
    %c7_41 = arith.constant 7 : index
    %c0_42 = arith.constant 0 : index
    %c0_43 = arith.constant 0 : index
    %96 = vector.load %arg2[%c7_41, %c0_42, %c0_43] : memref<8x8x128xf32, #tpu.memory_space<vmem>>, vector<1x8x128xf32>
    %97 = vector.shape_cast %96 : vector<1x8x128xf32> to vector<8x128xf32>
    %c43 = arith.constant 43 : index
    %98 = memref.load %arg1[%c43] : memref<128xf32, #tpu.memory_space<smem>>
    %99 = vector.broadcast %98 : f32 to vector<8x128xf32>
    %100 = arith.mulf %97, %99 : vector<8x128xf32>
    %101 = arith.addf %95, %100 : vector<8x128xf32>
    %c49 = arith.constant 49 : index
    %102 = memref.load %arg1[%c49] : memref<128xf32, #tpu.memory_space<smem>>
    %103 = vector.broadcast %102 : f32 to vector<8x128xf32>
    %104 = arith.addf %101, %103 : vector<8x128xf32>
    %105 = arith.negf %104 : vector<8x128xf32>
    %106 = math.exp %105 : vector<8x128xf32>
    %cst_44 = arith.constant 1.000000e+00 : f32
    %107 = vector.broadcast %cst_44 : f32 to vector<8x128xf32>
    %108 = arith.addf %107, %106 : vector<8x128xf32>
    %109 = arith.divf %107, %108 : vector<8x128xf32>
    %c0_45 = arith.constant 0 : index
    %c0_46 = arith.constant 0 : index
    %c0_47 = arith.constant 0 : index
    %110 = vector.load %arg2[%c0_45, %c0_46, %c0_47] : memref<8x8x128xf32, #tpu.memory_space<vmem>>, vector<1x8x128xf32>
    %111 = vector.shape_cast %110 : vector<1x8x128xf32> to vector<8x128xf32>
    %c2_48 = arith.constant 2 : index
    %112 = memref.load %arg1[%c2_48] : memref<128xf32, #tpu.memory_space<smem>>
    %113 = vector.broadcast %112 : f32 to vector<8x128xf32>
    %114 = arith.mulf %111, %113 : vector<8x128xf32>
    %c1_49 = arith.constant 1 : index
    %c0_50 = arith.constant 0 : index
    %c0_51 = arith.constant 0 : index
    %115 = vector.load %arg2[%c1_49, %c0_50, %c0_51] : memref<8x8x128xf32, #tpu.memory_space<vmem>>, vector<1x8x128xf32>
    %116 = vector.shape_cast %115 : vector<1x8x128xf32> to vector<8x128xf32>
    %c8 = arith.constant 8 : index
    %117 = memref.load %arg1[%c8] : memref<128xf32, #tpu.memory_space<smem>>
    %118 = vector.broadcast %117 : f32 to vector<8x128xf32>
    %119 = arith.mulf %116, %118 : vector<8x128xf32>
    %120 = arith.addf %114, %119 : vector<8x128xf32>
    %c2_52 = arith.constant 2 : index
    %c0_53 = arith.constant 0 : index
    %c0_54 = arith.constant 0 : index
    %121 = vector.load %arg2[%c2_52, %c0_53, %c0_54] : memref<8x8x128xf32, #tpu.memory_space<vmem>>, vector<1x8x128xf32>
    %122 = vector.shape_cast %121 : vector<1x8x128xf32> to vector<8x128xf32>
    %c14 = arith.constant 14 : index
    %123 = memref.load %arg1[%c14] : memref<128xf32, #tpu.memory_space<smem>>
    %124 = vector.broadcast %123 : f32 to vector<8x128xf32>
    %125 = arith.mulf %122, %124 : vector<8x128xf32>
    %126 = arith.addf %120, %125 : vector<8x128xf32>
    %c3_55 = arith.constant 3 : index
    %c0_56 = arith.constant 0 : index
    %c0_57 = arith.constant 0 : index
    %127 = vector.load %arg2[%c3_55, %c0_56, %c0_57] : memref<8x8x128xf32, #tpu.memory_space<vmem>>, vector<1x8x128xf32>
    %128 = vector.shape_cast %127 : vector<1x8x128xf32> to vector<8x128xf32>
    %c20 = arith.constant 20 : index
    %129 = memref.load %arg1[%c20] : memref<128xf32, #tpu.memory_space<smem>>
    %130 = vector.broadcast %129 : f32 to vector<8x128xf32>
    %131 = arith.mulf %128, %130 : vector<8x128xf32>
    %132 = arith.addf %126, %131 : vector<8x128xf32>
    %c4_58 = arith.constant 4 : index
    %c0_59 = arith.constant 0 : index
    %c0_60 = arith.constant 0 : index
    %133 = vector.load %arg2[%c4_58, %c0_59, %c0_60] : memref<8x8x128xf32, #tpu.memory_space<vmem>>, vector<1x8x128xf32>
    %134 = vector.shape_cast %133 : vector<1x8x128xf32> to vector<8x128xf32>
    %c26 = arith.constant 26 : index
    %135 = memref.load %arg1[%c26] : memref<128xf32, #tpu.memory_space<smem>>
    %136 = vector.broadcast %135 : f32 to vector<8x128xf32>
    %137 = arith.mulf %134, %136 : vector<8x128xf32>
    %138 = arith.addf %132, %137 : vector<8x128xf32>
    %c5_61 = arith.constant 5 : index
    %c0_62 = arith.constant 0 : index
    %c0_63 = arith.constant 0 : index
    %139 = vector.load %arg2[%c5_61, %c0_62, %c0_63] : memref<8x8x128xf32, #tpu.memory_space<vmem>>, vector<1x8x128xf32>
    %140 = vector.shape_cast %139 : vector<1x8x128xf32> to vector<8x128xf32>
    %c32 = arith.constant 32 : index
    %141 = memref.load %arg1[%c32] : memref<128xf32, #tpu.memory_space<smem>>
    %142 = vector.broadcast %141 : f32 to vector<8x128xf32>
    %143 = arith.mulf %140, %142 : vector<8x128xf32>
    %144 = arith.addf %138, %143 : vector<8x128xf32>
    %c6_64 = arith.constant 6 : index
    %c0_65 = arith.constant 0 : index
    %c0_66 = arith.constant 0 : index
    %145 = vector.load %arg2[%c6_64, %c0_65, %c0_66] : memref<8x8x128xf32, #tpu.memory_space<vmem>>, vector<1x8x128xf32>
    %146 = vector.shape_cast %145 : vector<1x8x128xf32> to vector<8x128xf32>
    %c38 = arith.constant 38 : index
    %147 = memref.load %arg1[%c38] : memref<128xf32, #tpu.memory_space<smem>>
    %148 = vector.broadcast %147 : f32 to vector<8x128xf32>
    %149 = arith.mulf %146, %148 : vector<8x128xf32>
    %150 = arith.addf %144, %149 : vector<8x128xf32>
    %c7_67 = arith.constant 7 : index
    %c0_68 = arith.constant 0 : index
    %c0_69 = arith.constant 0 : index
    %151 = vector.load %arg2[%c7_67, %c0_68, %c0_69] : memref<8x8x128xf32, #tpu.memory_space<vmem>>, vector<1x8x128xf32>
    %152 = vector.shape_cast %151 : vector<1x8x128xf32> to vector<8x128xf32>
    %c44 = arith.constant 44 : index
    %153 = memref.load %arg1[%c44] : memref<128xf32, #tpu.memory_space<smem>>
    %154 = vector.broadcast %153 : f32 to vector<8x128xf32>
    %155 = arith.mulf %152, %154 : vector<8x128xf32>
    %156 = arith.addf %150, %155 : vector<8x128xf32>
    %c50 = arith.constant 50 : index
    %157 = memref.load %arg1[%c50] : memref<128xf32, #tpu.memory_space<smem>>
    %158 = vector.broadcast %157 : f32 to vector<8x128xf32>
    %159 = arith.addf %156, %158 : vector<8x128xf32>
    %160 = arith.negf %159 : vector<8x128xf32>
    %161 = math.exp %160 : vector<8x128xf32>
    %cst_70 = arith.constant 1.000000e+00 : f32
    %162 = vector.broadcast %cst_70 : f32 to vector<8x128xf32>
    %163 = arith.addf %162, %161 : vector<8x128xf32>
    %164 = arith.divf %162, %163 : vector<8x128xf32>
    %c0_71 = arith.constant 0 : index
    %c0_72 = arith.constant 0 : index
    %c0_73 = arith.constant 0 : index
    %165 = vector.load %arg2[%c0_71, %c0_72, %c0_73] : memref<8x8x128xf32, #tpu.memory_space<vmem>>, vector<1x8x128xf32>
    %166 = vector.shape_cast %165 : vector<1x8x128xf32> to vector<8x128xf32>
    %c3_74 = arith.constant 3 : index
    %167 = memref.load %arg1[%c3_74] : memref<128xf32, #tpu.memory_space<smem>>
    %168 = vector.broadcast %167 : f32 to vector<8x128xf32>
    %169 = arith.mulf %166, %168 : vector<8x128xf32>
    %c1_75 = arith.constant 1 : index
    %c0_76 = arith.constant 0 : index
    %c0_77 = arith.constant 0 : index
    %170 = vector.load %arg2[%c1_75, %c0_76, %c0_77] : memref<8x8x128xf32, #tpu.memory_space<vmem>>, vector<1x8x128xf32>
    %171 = vector.shape_cast %170 : vector<1x8x128xf32> to vector<8x128xf32>
    %c9 = arith.constant 9 : index
    %172 = memref.load %arg1[%c9] : memref<128xf32, #tpu.memory_space<smem>>
    %173 = vector.broadcast %172 : f32 to vector<8x128xf32>
    %174 = arith.mulf %171, %173 : vector<8x128xf32>
    %175 = arith.addf %169, %174 : vector<8x128xf32>
    %c2_78 = arith.constant 2 : index
    %c0_79 = arith.constant 0 : index
    %c0_80 = arith.constant 0 : index
    %176 = vector.load %arg2[%c2_78, %c0_79, %c0_80] : memref<8x8x128xf32, #tpu.memory_space<vmem>>, vector<1x8x128xf32>
    %177 = vector.shape_cast %176 : vector<1x8x128xf32> to vector<8x128xf32>
    %c15 = arith.constant 15 : index
    %178 = memref.load %arg1[%c15] : memref<128xf32, #tpu.memory_space<smem>>
    %179 = vector.broadcast %178 : f32 to vector<8x128xf32>
    %180 = arith.mulf %177, %179 : vector<8x128xf32>
    %181 = arith.addf %175, %180 : vector<8x128xf32>
    %c3_81 = arith.constant 3 : index
    %c0_82 = arith.constant 0 : index
    %c0_83 = arith.constant 0 : index
    %182 = vector.load %arg2[%c3_81, %c0_82, %c0_83] : memref<8x8x128xf32, #tpu.memory_space<vmem>>, vector<1x8x128xf32>
    %183 = vector.shape_cast %182 : vector<1x8x128xf32> to vector<8x128xf32>
    %c21 = arith.constant 21 : index
    %184 = memref.load %arg1[%c21] : memref<128xf32, #tpu.memory_space<smem>>
    %185 = vector.broadcast %184 : f32 to vector<8x128xf32>
    %186 = arith.mulf %183, %185 : vector<8x128xf32>
    %187 = arith.addf %181, %186 : vector<8x128xf32>
    %c4_84 = arith.constant 4 : index
    %c0_85 = arith.constant 0 : index
    %c0_86 = arith.constant 0 : index
    %188 = vector.load %arg2[%c4_84, %c0_85, %c0_86] : memref<8x8x128xf32, #tpu.memory_space<vmem>>, vector<1x8x128xf32>
    %189 = vector.shape_cast %188 : vector<1x8x128xf32> to vector<8x128xf32>
    %c27 = arith.constant 27 : index
    %190 = memref.load %arg1[%c27] : memref<128xf32, #tpu.memory_space<smem>>
    %191 = vector.broadcast %190 : f32 to vector<8x128xf32>
    %192 = arith.mulf %189, %191 : vector<8x128xf32>
    %193 = arith.addf %187, %192 : vector<8x128xf32>
    %c5_87 = arith.constant 5 : index
    %c0_88 = arith.constant 0 : index
    %c0_89 = arith.constant 0 : index
    %194 = vector.load %arg2[%c5_87, %c0_88, %c0_89] : memref<8x8x128xf32, #tpu.memory_space<vmem>>, vector<1x8x128xf32>
    %195 = vector.shape_cast %194 : vector<1x8x128xf32> to vector<8x128xf32>
    %c33 = arith.constant 33 : index
    %196 = memref.load %arg1[%c33] : memref<128xf32, #tpu.memory_space<smem>>
    %197 = vector.broadcast %196 : f32 to vector<8x128xf32>
    %198 = arith.mulf %195, %197 : vector<8x128xf32>
    %199 = arith.addf %193, %198 : vector<8x128xf32>
    %c6_90 = arith.constant 6 : index
    %c0_91 = arith.constant 0 : index
    %c0_92 = arith.constant 0 : index
    %200 = vector.load %arg2[%c6_90, %c0_91, %c0_92] : memref<8x8x128xf32, #tpu.memory_space<vmem>>, vector<1x8x128xf32>
    %201 = vector.shape_cast %200 : vector<1x8x128xf32> to vector<8x128xf32>
    %c39 = arith.constant 39 : index
    %202 = memref.load %arg1[%c39] : memref<128xf32, #tpu.memory_space<smem>>
    %203 = vector.broadcast %202 : f32 to vector<8x128xf32>
    %204 = arith.mulf %201, %203 : vector<8x128xf32>
    %205 = arith.addf %199, %204 : vector<8x128xf32>
    %c7_93 = arith.constant 7 : index
    %c0_94 = arith.constant 0 : index
    %c0_95 = arith.constant 0 : index
    %206 = vector.load %arg2[%c7_93, %c0_94, %c0_95] : memref<8x8x128xf32, #tpu.memory_space<vmem>>, vector<1x8x128xf32>
    %207 = vector.shape_cast %206 : vector<1x8x128xf32> to vector<8x128xf32>
    %c45 = arith.constant 45 : index
    %208 = memref.load %arg1[%c45] : memref<128xf32, #tpu.memory_space<smem>>
    %209 = vector.broadcast %208 : f32 to vector<8x128xf32>
    %210 = arith.mulf %207, %209 : vector<8x128xf32>
    %211 = arith.addf %205, %210 : vector<8x128xf32>
    %c51 = arith.constant 51 : index
    %212 = memref.load %arg1[%c51] : memref<128xf32, #tpu.memory_space<smem>>
    %213 = vector.broadcast %212 : f32 to vector<8x128xf32>
    %214 = arith.addf %211, %213 : vector<8x128xf32>
    %215 = arith.negf %214 : vector<8x128xf32>
    %216 = math.exp %215 : vector<8x128xf32>
    %cst_96 = arith.constant 1.000000e+00 : f32
    %217 = vector.broadcast %cst_96 : f32 to vector<8x128xf32>
    %218 = arith.addf %217, %216 : vector<8x128xf32>
    %219 = arith.divf %217, %218 : vector<8x128xf32>
    %c0_97 = arith.constant 0 : index
    %c0_98 = arith.constant 0 : index
    %c0_99 = arith.constant 0 : index
    %220 = vector.load %arg2[%c0_97, %c0_98, %c0_99] : memref<8x8x128xf32, #tpu.memory_space<vmem>>, vector<1x8x128xf32>
    %221 = vector.shape_cast %220 : vector<1x8x128xf32> to vector<8x128xf32>
    %c4_100 = arith.constant 4 : index
    %222 = memref.load %arg1[%c4_100] : memref<128xf32, #tpu.memory_space<smem>>
    %223 = vector.broadcast %222 : f32 to vector<8x128xf32>
    %224 = arith.mulf %221, %223 : vector<8x128xf32>
    %c1_101 = arith.constant 1 : index
    %c0_102 = arith.constant 0 : index
    %c0_103 = arith.constant 0 : index
    %225 = vector.load %arg2[%c1_101, %c0_102, %c0_103] : memref<8x8x128xf32, #tpu.memory_space<vmem>>, vector<1x8x128xf32>
    %226 = vector.shape_cast %225 : vector<1x8x128xf32> to vector<8x128xf32>
    %c10 = arith.constant 10 : index
    %227 = memref.load %arg1[%c10] : memref<128xf32, #tpu.memory_space<smem>>
    %228 = vector.broadcast %227 : f32 to vector<8x128xf32>
    %229 = arith.mulf %226, %228 : vector<8x128xf32>
    %230 = arith.addf %224, %229 : vector<8x128xf32>
    %c2_104 = arith.constant 2 : index
    %c0_105 = arith.constant 0 : index
    %c0_106 = arith.constant 0 : index
    %231 = vector.load %arg2[%c2_104, %c0_105, %c0_106] : memref<8x8x128xf32, #tpu.memory_space<vmem>>, vector<1x8x128xf32>
    %232 = vector.shape_cast %231 : vector<1x8x128xf32> to vector<8x128xf32>
    %c16 = arith.constant 16 : index
    %233 = memref.load %arg1[%c16] : memref<128xf32, #tpu.memory_space<smem>>
    %234 = vector.broadcast %233 : f32 to vector<8x128xf32>
    %235 = arith.mulf %232, %234 : vector<8x128xf32>
    %236 = arith.addf %230, %235 : vector<8x128xf32>
    %c3_107 = arith.constant 3 : index
    %c0_108 = arith.constant 0 : index
    %c0_109 = arith.constant 0 : index
    %237 = vector.load %arg2[%c3_107, %c0_108, %c0_109] : memref<8x8x128xf32, #tpu.memory_space<vmem>>, vector<1x8x128xf32>
    %238 = vector.shape_cast %237 : vector<1x8x128xf32> to vector<8x128xf32>
    %c22 = arith.constant 22 : index
    %239 = memref.load %arg1[%c22] : memref<128xf32, #tpu.memory_space<smem>>
    %240 = vector.broadcast %239 : f32 to vector<8x128xf32>
    %241 = arith.mulf %238, %240 : vector<8x128xf32>
    %242 = arith.addf %236, %241 : vector<8x128xf32>
    %c4_110 = arith.constant 4 : index
    %c0_111 = arith.constant 0 : index
    %c0_112 = arith.constant 0 : index
    %243 = vector.load %arg2[%c4_110, %c0_111, %c0_112] : memref<8x8x128xf32, #tpu.memory_space<vmem>>, vector<1x8x128xf32>
    %244 = vector.shape_cast %243 : vector<1x8x128xf32> to vector<8x128xf32>
    %c28 = arith.constant 28 : index
    %245 = memref.load %arg1[%c28] : memref<128xf32, #tpu.memory_space<smem>>
    %246 = vector.broadcast %245 : f32 to vector<8x128xf32>
    %247 = arith.mulf %244, %246 : vector<8x128xf32>
    %248 = arith.addf %242, %247 : vector<8x128xf32>
    %c5_113 = arith.constant 5 : index
    %c0_114 = arith.constant 0 : index
    %c0_115 = arith.constant 0 : index
    %249 = vector.load %arg2[%c5_113, %c0_114, %c0_115] : memref<8x8x128xf32, #tpu.memory_space<vmem>>, vector<1x8x128xf32>
    %250 = vector.shape_cast %249 : vector<1x8x128xf32> to vector<8x128xf32>
    %c34 = arith.constant 34 : index
    %251 = memref.load %arg1[%c34] : memref<128xf32, #tpu.memory_space<smem>>
    %252 = vector.broadcast %251 : f32 to vector<8x128xf32>
    %253 = arith.mulf %250, %252 : vector<8x128xf32>
    %254 = arith.addf %248, %253 : vector<8x128xf32>
    %c6_116 = arith.constant 6 : index
    %c0_117 = arith.constant 0 : index
    %c0_118 = arith.constant 0 : index
    %255 = vector.load %arg2[%c6_116, %c0_117, %c0_118] : memref<8x8x128xf32, #tpu.memory_space<vmem>>, vector<1x8x128xf32>
    %256 = vector.shape_cast %255 : vector<1x8x128xf32> to vector<8x128xf32>
    %c40 = arith.constant 40 : index
    %257 = memref.load %arg1[%c40] : memref<128xf32, #tpu.memory_space<smem>>
    %258 = vector.broadcast %257 : f32 to vector<8x128xf32>
    %259 = arith.mulf %256, %258 : vector<8x128xf32>
    %260 = arith.addf %254, %259 : vector<8x128xf32>
    %c7_119 = arith.constant 7 : index
    %c0_120 = arith.constant 0 : index
    %c0_121 = arith.constant 0 : index
    %261 = vector.load %arg2[%c7_119, %c0_120, %c0_121] : memref<8x8x128xf32, #tpu.memory_space<vmem>>, vector<1x8x128xf32>
    %262 = vector.shape_cast %261 : vector<1x8x128xf32> to vector<8x128xf32>
    %c46 = arith.constant 46 : index
    %263 = memref.load %arg1[%c46] : memref<128xf32, #tpu.memory_space<smem>>
    %264 = vector.broadcast %263 : f32 to vector<8x128xf32>
    %265 = arith.mulf %262, %264 : vector<8x128xf32>
    %266 = arith.addf %260, %265 : vector<8x128xf32>
    %c52 = arith.constant 52 : index
    %267 = memref.load %arg1[%c52] : memref<128xf32, #tpu.memory_space<smem>>
    %268 = vector.broadcast %267 : f32 to vector<8x128xf32>
    %269 = arith.addf %266, %268 : vector<8x128xf32>
    %270 = arith.negf %269 : vector<8x128xf32>
    %271 = math.exp %270 : vector<8x128xf32>
    %cst_122 = arith.constant 1.000000e+00 : f32
    %272 = vector.broadcast %cst_122 : f32 to vector<8x128xf32>
    %273 = arith.addf %272, %271 : vector<8x128xf32>
    %274 = arith.divf %272, %273 : vector<8x128xf32>
    %c0_123 = arith.constant 0 : index
    %c0_124 = arith.constant 0 : index
    %c0_125 = arith.constant 0 : index
    %275 = vector.load %arg2[%c0_123, %c0_124, %c0_125] : memref<8x8x128xf32, #tpu.memory_space<vmem>>, vector<1x8x128xf32>
    %276 = vector.shape_cast %275 : vector<1x8x128xf32> to vector<8x128xf32>
    %c5_126 = arith.constant 5 : index
    %277 = memref.load %arg1[%c5_126] : memref<128xf32, #tpu.memory_space<smem>>
    %278 = vector.broadcast %277 : f32 to vector<8x128xf32>
    %279 = arith.mulf %276, %278 : vector<8x128xf32>
    %c1_127 = arith.constant 1 : index
    %c0_128 = arith.constant 0 : index
    %c0_129 = arith.constant 0 : index
    %280 = vector.load %arg2[%c1_127, %c0_128, %c0_129] : memref<8x8x128xf32, #tpu.memory_space<vmem>>, vector<1x8x128xf32>
    %281 = vector.shape_cast %280 : vector<1x8x128xf32> to vector<8x128xf32>
    %c11 = arith.constant 11 : index
    %282 = memref.load %arg1[%c11] : memref<128xf32, #tpu.memory_space<smem>>
    %283 = vector.broadcast %282 : f32 to vector<8x128xf32>
    %284 = arith.mulf %281, %283 : vector<8x128xf32>
    %285 = arith.addf %279, %284 : vector<8x128xf32>
    %c2_130 = arith.constant 2 : index
    %c0_131 = arith.constant 0 : index
    %c0_132 = arith.constant 0 : index
    %286 = vector.load %arg2[%c2_130, %c0_131, %c0_132] : memref<8x8x128xf32, #tpu.memory_space<vmem>>, vector<1x8x128xf32>
    %287 = vector.shape_cast %286 : vector<1x8x128xf32> to vector<8x128xf32>
    %c17 = arith.constant 17 : index
    %288 = memref.load %arg1[%c17] : memref<128xf32, #tpu.memory_space<smem>>
    %289 = vector.broadcast %288 : f32 to vector<8x128xf32>
    %290 = arith.mulf %287, %289 : vector<8x128xf32>
    %291 = arith.addf %285, %290 : vector<8x128xf32>
    %c3_133 = arith.constant 3 : index
    %c0_134 = arith.constant 0 : index
    %c0_135 = arith.constant 0 : index
    %292 = vector.load %arg2[%c3_133, %c0_134, %c0_135] : memref<8x8x128xf32, #tpu.memory_space<vmem>>, vector<1x8x128xf32>
    %293 = vector.shape_cast %292 : vector<1x8x128xf32> to vector<8x128xf32>
    %c23 = arith.constant 23 : index
    %294 = memref.load %arg1[%c23] : memref<128xf32, #tpu.memory_space<smem>>
    %295 = vector.broadcast %294 : f32 to vector<8x128xf32>
    %296 = arith.mulf %293, %295 : vector<8x128xf32>
    %297 = arith.addf %291, %296 : vector<8x128xf32>
    %c4_136 = arith.constant 4 : index
    %c0_137 = arith.constant 0 : index
    %c0_138 = arith.constant 0 : index
    %298 = vector.load %arg2[%c4_136, %c0_137, %c0_138] : memref<8x8x128xf32, #tpu.memory_space<vmem>>, vector<1x8x128xf32>
    %299 = vector.shape_cast %298 : vector<1x8x128xf32> to vector<8x128xf32>
    %c29 = arith.constant 29 : index
    %300 = memref.load %arg1[%c29] : memref<128xf32, #tpu.memory_space<smem>>
    %301 = vector.broadcast %300 : f32 to vector<8x128xf32>
    %302 = arith.mulf %299, %301 : vector<8x128xf32>
    %303 = arith.addf %297, %302 : vector<8x128xf32>
    %c5_139 = arith.constant 5 : index
    %c0_140 = arith.constant 0 : index
    %c0_141 = arith.constant 0 : index
    %304 = vector.load %arg2[%c5_139, %c0_140, %c0_141] : memref<8x8x128xf32, #tpu.memory_space<vmem>>, vector<1x8x128xf32>
    %305 = vector.shape_cast %304 : vector<1x8x128xf32> to vector<8x128xf32>
    %c35 = arith.constant 35 : index
    %306 = memref.load %arg1[%c35] : memref<128xf32, #tpu.memory_space<smem>>
    %307 = vector.broadcast %306 : f32 to vector<8x128xf32>
    %308 = arith.mulf %305, %307 : vector<8x128xf32>
    %309 = arith.addf %303, %308 : vector<8x128xf32>
    %c6_142 = arith.constant 6 : index
    %c0_143 = arith.constant 0 : index
    %c0_144 = arith.constant 0 : index
    %310 = vector.load %arg2[%c6_142, %c0_143, %c0_144] : memref<8x8x128xf32, #tpu.memory_space<vmem>>, vector<1x8x128xf32>
    %311 = vector.shape_cast %310 : vector<1x8x128xf32> to vector<8x128xf32>
    %c41 = arith.constant 41 : index
    %312 = memref.load %arg1[%c41] : memref<128xf32, #tpu.memory_space<smem>>
    %313 = vector.broadcast %312 : f32 to vector<8x128xf32>
    %314 = arith.mulf %311, %313 : vector<8x128xf32>
    %315 = arith.addf %309, %314 : vector<8x128xf32>
    %c7_145 = arith.constant 7 : index
    %c0_146 = arith.constant 0 : index
    %c0_147 = arith.constant 0 : index
    %316 = vector.load %arg2[%c7_145, %c0_146, %c0_147] : memref<8x8x128xf32, #tpu.memory_space<vmem>>, vector<1x8x128xf32>
    %317 = vector.shape_cast %316 : vector<1x8x128xf32> to vector<8x128xf32>
    %c47 = arith.constant 47 : index
    %318 = memref.load %arg1[%c47] : memref<128xf32, #tpu.memory_space<smem>>
    %319 = vector.broadcast %318 : f32 to vector<8x128xf32>
    %320 = arith.mulf %317, %319 : vector<8x128xf32>
    %321 = arith.addf %315, %320 : vector<8x128xf32>
    %c53 = arith.constant 53 : index
    %322 = memref.load %arg1[%c53] : memref<128xf32, #tpu.memory_space<smem>>
    %323 = vector.broadcast %322 : f32 to vector<8x128xf32>
    %324 = arith.addf %321, %323 : vector<8x128xf32>
    %325 = arith.negf %324 : vector<8x128xf32>
    %326 = math.exp %325 : vector<8x128xf32>
    %cst_148 = arith.constant 1.000000e+00 : f32
    %327 = vector.broadcast %cst_148 : f32 to vector<8x128xf32>
    %328 = arith.addf %327, %326 : vector<8x128xf32>
    %329 = arith.divf %327, %328 : vector<8x128xf32>
    %c54 = arith.constant 54 : index
    %330 = memref.load %arg1[%c54] : memref<128xf32, #tpu.memory_space<smem>>
    %331 = vector.broadcast %330 : f32 to vector<8x128xf32>
    %332 = arith.mulf %54, %331 : vector<8x128xf32>
    %c57 = arith.constant 57 : index
    %333 = memref.load %arg1[%c57] : memref<128xf32, #tpu.memory_space<smem>>
    %334 = vector.broadcast %333 : f32 to vector<8x128xf32>
    %335 = arith.mulf %109, %334 : vector<8x128xf32>
    %336 = arith.addf %332, %335 : vector<8x128xf32>
    %c60 = arith.constant 60 : index
    %337 = memref.load %arg1[%c60] : memref<128xf32, #tpu.memory_space<smem>>
    %338 = vector.broadcast %337 : f32 to vector<8x128xf32>
    %339 = arith.mulf %164, %338 : vector<8x128xf32>
    %340 = arith.addf %336, %339 : vector<8x128xf32>
    %c63 = arith.constant 63 : index
    %341 = memref.load %arg1[%c63] : memref<128xf32, #tpu.memory_space<smem>>
    %342 = vector.broadcast %341 : f32 to vector<8x128xf32>
    %343 = arith.mulf %219, %342 : vector<8x128xf32>
    %344 = arith.addf %340, %343 : vector<8x128xf32>
    %c66 = arith.constant 66 : index
    %345 = memref.load %arg1[%c66] : memref<128xf32, #tpu.memory_space<smem>>
    %346 = vector.broadcast %345 : f32 to vector<8x128xf32>
    %347 = arith.mulf %274, %346 : vector<8x128xf32>
    %348 = arith.addf %344, %347 : vector<8x128xf32>
    %c69 = arith.constant 69 : index
    %349 = memref.load %arg1[%c69] : memref<128xf32, #tpu.memory_space<smem>>
    %350 = vector.broadcast %349 : f32 to vector<8x128xf32>
    %351 = arith.mulf %329, %350 : vector<8x128xf32>
    %352 = arith.addf %348, %351 : vector<8x128xf32>
    %c72 = arith.constant 72 : index
    %353 = memref.load %arg1[%c72] : memref<128xf32, #tpu.memory_space<smem>>
    %354 = vector.broadcast %353 : f32 to vector<8x128xf32>
    %355 = arith.addf %352, %354 : vector<8x128xf32>
    %356 = arith.negf %355 : vector<8x128xf32>
    %357 = math.exp %356 : vector<8x128xf32>
    %cst_149 = arith.constant 1.000000e+00 : f32
    %358 = vector.broadcast %cst_149 : f32 to vector<8x128xf32>
    %359 = arith.addf %358, %357 : vector<8x128xf32>
    %360 = arith.divf %358, %359 : vector<8x128xf32>
    %c55 = arith.constant 55 : index
    %361 = memref.load %arg1[%c55] : memref<128xf32, #tpu.memory_space<smem>>
    %362 = vector.broadcast %361 : f32 to vector<8x128xf32>
    %363 = arith.mulf %54, %362 : vector<8x128xf32>
    %c58 = arith.constant 58 : index
    %364 = memref.load %arg1[%c58] : memref<128xf32, #tpu.memory_space<smem>>
    %365 = vector.broadcast %364 : f32 to vector<8x128xf32>
    %366 = arith.mulf %109, %365 : vector<8x128xf32>
    %367 = arith.addf %363, %366 : vector<8x128xf32>
    %c61 = arith.constant 61 : index
    %368 = memref.load %arg1[%c61] : memref<128xf32, #tpu.memory_space<smem>>
    %369 = vector.broadcast %368 : f32 to vector<8x128xf32>
    %370 = arith.mulf %164, %369 : vector<8x128xf32>
    %371 = arith.addf %367, %370 : vector<8x128xf32>
    %c64 = arith.constant 64 : index
    %372 = memref.load %arg1[%c64] : memref<128xf32, #tpu.memory_space<smem>>
    %373 = vector.broadcast %372 : f32 to vector<8x128xf32>
    %374 = arith.mulf %219, %373 : vector<8x128xf32>
    %375 = arith.addf %371, %374 : vector<8x128xf32>
    %c67 = arith.constant 67 : index
    %376 = memref.load %arg1[%c67] : memref<128xf32, #tpu.memory_space<smem>>
    %377 = vector.broadcast %376 : f32 to vector<8x128xf32>
    %378 = arith.mulf %274, %377 : vector<8x128xf32>
    %379 = arith.addf %375, %378 : vector<8x128xf32>
    %c70 = arith.constant 70 : index
    %380 = memref.load %arg1[%c70] : memref<128xf32, #tpu.memory_space<smem>>
    %381 = vector.broadcast %380 : f32 to vector<8x128xf32>
    %382 = arith.mulf %329, %381 : vector<8x128xf32>
    %383 = arith.addf %379, %382 : vector<8x128xf32>
    %c73 = arith.constant 73 : index
    %384 = memref.load %arg1[%c73] : memref<128xf32, #tpu.memory_space<smem>>
    %385 = vector.broadcast %384 : f32 to vector<8x128xf32>
    %386 = arith.addf %383, %385 : vector<8x128xf32>
    %387 = arith.negf %386 : vector<8x128xf32>
    %388 = math.exp %387 : vector<8x128xf32>
    %cst_150 = arith.constant 1.000000e+00 : f32
    %389 = vector.broadcast %cst_150 : f32 to vector<8x128xf32>
    %390 = arith.addf %389, %388 : vector<8x128xf32>
    %391 = arith.divf %389, %390 : vector<8x128xf32>
    %c56 = arith.constant 56 : index
    %392 = memref.load %arg1[%c56] : memref<128xf32, #tpu.memory_space<smem>>
    %393 = vector.broadcast %392 : f32 to vector<8x128xf32>
    %394 = arith.mulf %54, %393 : vector<8x128xf32>
    %c59 = arith.constant 59 : index
    %395 = memref.load %arg1[%c59] : memref<128xf32, #tpu.memory_space<smem>>
    %396 = vector.broadcast %395 : f32 to vector<8x128xf32>
    %397 = arith.mulf %109, %396 : vector<8x128xf32>
    %398 = arith.addf %394, %397 : vector<8x128xf32>
    %c62 = arith.constant 62 : index
    %399 = memref.load %arg1[%c62] : memref<128xf32, #tpu.memory_space<smem>>
    %400 = vector.broadcast %399 : f32 to vector<8x128xf32>
    %401 = arith.mulf %164, %400 : vector<8x128xf32>
    %402 = arith.addf %398, %401 : vector<8x128xf32>
    %c65 = arith.constant 65 : index
    %403 = memref.load %arg1[%c65] : memref<128xf32, #tpu.memory_space<smem>>
    %404 = vector.broadcast %403 : f32 to vector<8x128xf32>
    %405 = arith.mulf %219, %404 : vector<8x128xf32>
    %406 = arith.addf %402, %405 : vector<8x128xf32>
    %c68 = arith.constant 68 : index
    %407 = memref.load %arg1[%c68] : memref<128xf32, #tpu.memory_space<smem>>
    %408 = vector.broadcast %407 : f32 to vector<8x128xf32>
    %409 = arith.mulf %274, %408 : vector<8x128xf32>
    %410 = arith.addf %406, %409 : vector<8x128xf32>
    %c71 = arith.constant 71 : index
    %411 = memref.load %arg1[%c71] : memref<128xf32, #tpu.memory_space<smem>>
    %412 = vector.broadcast %411 : f32 to vector<8x128xf32>
    %413 = arith.mulf %329, %412 : vector<8x128xf32>
    %414 = arith.addf %410, %413 : vector<8x128xf32>
    %c74 = arith.constant 74 : index
    %415 = memref.load %arg1[%c74] : memref<128xf32, #tpu.memory_space<smem>>
    %416 = vector.broadcast %415 : f32 to vector<8x128xf32>
    %417 = arith.addf %414, %416 : vector<8x128xf32>
    %418 = arith.negf %417 : vector<8x128xf32>
    %419 = math.exp %418 : vector<8x128xf32>
    %cst_151 = arith.constant 1.000000e+00 : f32
    %420 = vector.broadcast %cst_151 : f32 to vector<8x128xf32>
    %421 = arith.addf %420, %419 : vector<8x128xf32>
    %422 = arith.divf %420, %421 : vector<8x128xf32>
    %c75 = arith.constant 75 : index
    %423 = memref.load %arg1[%c75] : memref<128xf32, #tpu.memory_space<smem>>
    %424 = vector.broadcast %423 : f32 to vector<8x128xf32>
    %425 = arith.mulf %360, %424 : vector<8x128xf32>
    %c76 = arith.constant 76 : index
    %426 = memref.load %arg1[%c76] : memref<128xf32, #tpu.memory_space<smem>>
    %427 = vector.broadcast %426 : f32 to vector<8x128xf32>
    %428 = arith.mulf %391, %427 : vector<8x128xf32>
    %429 = arith.addf %425, %428 : vector<8x128xf32>
    %c77 = arith.constant 77 : index
    %430 = memref.load %arg1[%c77] : memref<128xf32, #tpu.memory_space<smem>>
    %431 = vector.broadcast %430 : f32 to vector<8x128xf32>
    %432 = arith.mulf %422, %431 : vector<8x128xf32>
    %433 = arith.addf %429, %432 : vector<8x128xf32>
    %c78 = arith.constant 78 : index
    %434 = memref.load %arg1[%c78] : memref<128xf32, #tpu.memory_space<smem>>
    %435 = vector.broadcast %434 : f32 to vector<8x128xf32>
    %436 = arith.addf %433, %435 : vector<8x128xf32>
    %437 = arith.negf %436 : vector<8x128xf32>
    %438 = math.exp %437 : vector<8x128xf32>
    %cst_152 = arith.constant 1.000000e+00 : f32
    %439 = vector.broadcast %cst_152 : f32 to vector<8x128xf32>
    %440 = arith.addf %439, %438 : vector<8x128xf32>
    %441 = arith.divf %439, %440 : vector<8x128xf32>
    %c0_153 = arith.constant 0 : index
    %c0_154 = arith.constant 0 : index
    %442 = vector.load %arg3[%c0_153, %c0_154] : memref<8x128xf32, #tpu.memory_space<vmem>>, vector<8x128xf32>
    tpu.vector_store %arg3[%c0_153, %c0_154], %441 {strides = array<i32>} : memref<8x128xf32, #tpu.memory_space<vmem>>, vector<8x128xf32>,
    return
  }
  func.func @transform_0(%arg0: i32) -> i32 {
    %c0_i32 = arith.constant 0 : i32
    %c0_i32_0 = arith.constant 0 : i32
    return %c0_i32 : i32
  }
  func.func @transform_1(%arg0: i32) -> (i32, i32, i32) {
    %c0_i32 = arith.constant 0 : i32
    %c0_i32_0 = arith.constant 0 : i32
    %c0_i32_1 = arith.constant 0 : i32
    return %c0_i32, %arg0, %c0_i32_0 : i32, i32, i32
  }
  func.func @transform_2(%arg0: i32) -> (i32, i32) {
    %c0_i32 = arith.constant 0 : i32
    %c0_i32_0 = arith.constant 0 : i32
    return %arg0, %c0_i32 : i32, i32
  }
}

</mosaic_0001>

<llo_original>
// kernel: tpu_custom_call.1
$region0: #{tpu_custom_call.1}
  #allocation0 [shape = 'u32[]', space=smem, size = 0x4, offset = 0x4, fixed_abs, tag = 'smem constant byte address 0x4 - core index']
  #allocation1 [shape = 'u32[144,128]{1,0:T(1,128)}', space=vmem, size = 0x12000, scoped, tag = 'internal scratch']
  %s0 = inlined_call_operand.hbm [shape: f32[128], index: 0, kind: input, shape index: {}]
  %s1 = inlined_call_operand.hbm [shape: f32[8,8,128], index: 1, kind: input, shape index: {}]
  %s2 = inlined_call_operand.hbm [shape: f32[8,128], index: 2, kind: output, shape index: {}]
  %s3 = sld [smem:[#allocation0]]
  $region26: #{tpu_custom_call.1} parent=0
    _
  %s5 = ssub.s32 1, %s3
  %s6 = scalar_select 0, %s5, %s3
  $region1: #{tpu_custom_call.1} parent=0
    #allocation2 [shape = 'u8[512]{0}', space=smem, size = 0x200, scoped, tag = 'input window, operand 0, single buffered']
    #allocation3 [shape = 's32[1]{0}', space=sflag, size = 0x4, scoped, tag = 'scoped memory for tpu_custom_call.1']
    #allocation4 [shape = 's32[1]{0}', space=sflag, size = 0x4, scoped, tag = 'scoped memory for tpu_custom_call.1']
    #allocation5 [shape = 's32[1]{0}', space=sflag, size = 0x4, scoped, tag = 'scoped memory for tpu_custom_call.1']
    #allocation6 [shape = 'u8[32768]{0}', space=vmem, size = 0x8000, scoped, tag = 'input window, operand 1, single buffered']
    #allocation7 [shape = 'u8[4096]{0}', space=vmem, size = 0x1000, scoped, tag = 'output window, operand 0, single buffered']
    %7 = vsyncpa [#allocation5], 0
    %8 = vsyncpa [#allocation3], 0
    %9 = vsyncpa [#allocation4], 0
    // Predicated region
    $region2: #{tpu_custom_call.1} parent=1 // pred_check
      _
    $region3: #{tpu_custom_call.1} parent=1 // pred_check_branch
      %11 = sbr.rel (0) target = $region5
    $region4: #{tpu_custom_call.1} parent=1 // pred_region
      %s13 = ssub.s32 16, 16
      %14 = vsyncadd [#allocation5], %s13
      %17 = dma.hbm_to_smem %s0, 16, [#allocation2], [#allocation5]
    $region5: #{tpu_custom_call.1} parent=1 // pred_fallthru
      _
    // Predicated region
    $region6: #{tpu_custom_call.1} parent=1 // pred_check
      _
    $region7: #{tpu_custom_call.1} parent=1 // pred_check_branch
      %19 = sbr.rel (0) target = $region9
    $region8: #{tpu_custom_call.1} parent=1 // pred_region
      %s21 = ssub.s32 1024, 1024
      %22 = vsyncadd [#allocation3], %s21
      %s23 = sshll.u32 [#allocation6], 4
      %s24 = int_to_ptr.vmem [resolvable:$true] %s23
      %29 = dma.hbm_to_vmem [thread:$0]  %s1, 1024, %s24, [#allocation3], 128, 128, 8
    $region9: #{tpu_custom_call.1} parent=1 // pred_fallthru
      _
    // Predicated region
    $region10: #{tpu_custom_call.1} parent=1 // pred_check
      _
    $region11: #{tpu_custom_call.1} parent=1 // pred_check_branch
      %31 = sbr.rel (0) target = $region13
    $region12: #{tpu_custom_call.1} parent=1 // pred_region
      %32 = dma.done [#allocation5], 16
    $region13: #{tpu_custom_call.1} parent=1 // pred_fallthru
      _
    // Predicated region
    $region14: #{tpu_custom_call.1} parent=1 // pred_check
      _
    $region15: #{tpu_custom_call.1} parent=1 // pred_check_branch
      %34 = sbr.rel (0) target = $region17
    $region16: #{tpu_custom_call.1} parent=1 // pred_region
      %35 = dma.done [#allocation3], 1024
    $region17: #{tpu_custom_call.1} parent=1 // pred_fallthru
      _
    %36 = sfence
    %v37 = vld [vmem:[#allocation6] sm:$0xff]
    %s38 = sld [smem:[#allocation2]]
    %v39 = vstv %s38
    %v40 = vmul.f32 %v37, %v39
    %s41 = scalar_lea.vmem [#allocation6], 8
    %v42 = vld [vmem:[%s41] sm:$0xff]
    %s43 = sld [smem:[#allocation2 + $0x6]]
    %v44 = vstv %s43
    %v45 = vmul.f32 %v42, %v44
    %v46 = vadd.f32 %v40, %v45
    %s47 = scalar_lea.vmem [#allocation6], 16
    %v48 = vld [vmem:[%s47] sm:$0xff]
    %s49 = sld [smem:[#allocation2 + $0xc]]
    %v50 = vstv %s49
    %v51 = vmul.f32 %v48, %v50
    %v52 = vadd.f32 %v46, %v51
    %s53 = scalar_lea.vmem [#allocation6], 24
    %v54 = vld [vmem:[%s53] sm:$0xff]
    %s55 = sld [smem:[#allocation2 + $0x12]]
    %v56 = vstv %s55
    %v57 = vmul.f32 %v54, %v56
    %v58 = vadd.f32 %v52, %v57
    %s59 = scalar_lea.vmem [#allocation6], 32
    %v60 = vld [vmem:[%s59] sm:$0xff]
    %s61 = sld [smem:[#allocation2 + $0x18]]
    %v62 = vstv %s61
    %v63 = vmul.f32 %v60, %v62
    %v64 = vadd.f32 %v58, %v63
    %s65 = scalar_lea.vmem [#allocation6], 40
    %v66 = vld [vmem:[%s65] sm:$0xff]
    %s67 = sld [smem:[#allocation2 + $0x1e]]
    %v68 = vstv %s67
    %v69 = vmul.f32 %v66, %v68
    %v70 = vadd.f32 %v64, %v69
    %s71 = scalar_lea.vmem [#allocation6], 48
    %v72 = vld [vmem:[%s71] sm:$0xff]
    %s73 = sld [smem:[#allocation2 + $0x24]]
    %v74 = vstv %s73
    %v75 = vmul.f32 %v72, %v74
    %v76 = vadd.f32 %v70, %v75
    %s77 = scalar_lea.vmem [#allocation6], 56
    %v78 = vld [vmem:[%s77] sm:$0xff]
    %s79 = sld [smem:[#allocation2 + $0x2a]]
    %v80 = vstv %s79
    %v81 = vmul.f32 %v78, %v80
    %v82 = vadd.f32 %v76, %v81
    %s83 = sld [smem:[#allocation2 + $0x30]]
    %v84 = vstv %s83
    %v85 = vadd.f32 %v82, %v84
    %v86 = vxor.u32 %v85, 2147483648
    %v87 = vmul.f32 %v86, 1.442695
    %v88 = vpow.pop %v87
    %v89 = vadd.f32 %v88, 1.0
    %v90 = vrcp.pop %v89
    %v91 = vmul.f32 1.0, %v90
    %s92 = sld [smem:[#allocation2 + $0x1]]
    %v93 = vstv %s92
    %v94 = vmul.f32 %v37, %v93
    %s95 = sld [smem:[#allocation2 + $0x7]]
    %v96 = vstv %s95
    %v97 = vmul.f32 %v42, %v96
    %v98 = vadd.f32 %v94, %v97
    %s99 = sld [smem:[#allocation2 + $0xd]]
    %v100 = vstv %s99
    %v101 = vmul.f32 %v48, %v100
    %v102 = vadd.f32 %v98, %v101
    %s103 = sld [smem:[#allocation2 + $0x13]]
    %v104 = vstv %s103
    %v105 = vmul.f32 %v54, %v104
    %v106 = vadd.f32 %v102, %v105
    %s107 = sld [smem:[#allocation2 + $0x19]]
    %v108 = vstv %s107
    %v109 = vmul.f32 %v60, %v108
    %v110 = vadd.f32 %v106, %v109
    %s111 = sld [smem:[#allocation2 + $0x1f]]
    %v112 = vstv %s111
    %v113 = vmul.f32 %v66, %v112
    %v114 = vadd.f32 %v110, %v113
    %s115 = sld [smem:[#allocation2 + $0x25]]
    %v116 = vstv %s115
    %v117 = vmul.f32 %v72, %v116
    %v118 = vadd.f32 %v114, %v117
    %s119 = sld [smem:[#allocation2 + $0x2b]]
    %v120 = vstv %s119
    %v121 = vmul.f32 %v78, %v120
    %v122 = vadd.f32 %v118, %v121
    %s123 = sld [smem:[#allocation2 + $0x31]]
    %v124 = vstv %s123
    %v125 = vadd.f32 %v122, %v124
    %v126 = vxor.u32 %v125, 2147483648
    %v127 = vmul.f32 %v126, 1.442695
    %v128 = vpow.pop %v127
    %v129 = vadd.f32 %v128, 1.0
    %v130 = vrcp.pop %v129
    %v131 = vmul.f32 1.0, %v130
    %s132 = sld [smem:[#allocation2 + $0x2]]
    %v133 = vstv %s132
    %v134 = vmul.f32 %v37, %v133
    %s135 = sld [smem:[#allocation2 + $0x8]]
    %v136 = vstv %s135
    %v137 = vmul.f32 %v42, %v136
    %v138 = vadd.f32 %v134, %v137
    %s139 = sld [smem:[#allocation2 + $0xe]]
    %v140 = vstv %s139
    %v141 = vmul.f32 %v48, %v140
    %v142 = vadd.f32 %v138, %v141
    %s143 = sld [smem:[#allocation2 + $0x14]]
    %v144 = vstv %s143
    %v145 = vmul.f32 %v54, %v144
    %v146 = vadd.f32 %v142, %v145
    %s147 = sld [smem:[#allocation2 + $0x1a]]
    %v148 = vstv %s147
    %v149 = vmul.f32 %v60, %v148
    %v150 = vadd.f32 %v146, %v149
    %s151 = sld [smem:[#allocation2 + $0x20]]
    %v152 = vstv %s151
    %v153 = vmul.f32 %v66, %v152
    %v154 = vadd.f32 %v150, %v153
    %s155 = sld [smem:[#allocation2 + $0x26]]
    %v156 = vstv %s155
    %v157 = vmul.f32 %v72, %v156
    %v158 = vadd.f32 %v154, %v157
    %s159 = sld [smem:[#allocation2 + $0x2c]]
    %v160 = vstv %s159
    %v161 = vmul.f32 %v78, %v160
    %v162 = vadd.f32 %v158, %v161
    %s163 = sld [smem:[#allocation2 + $0x32]]
    %v164 = vstv %s163
    %v165 = vadd.f32 %v162, %v164
    %v166 = vxor.u32 %v165, 2147483648
    %v167 = vmul.f32 %v166, 1.442695
    %v168 = vpow.pop %v167
    %v169 = vadd.f32 %v168, 1.0
    %v170 = vrcp.pop %v169
    %v171 = vmul.f32 1.0, %v170
    %s172 = sld [smem:[#allocation2 + $0x3]]
    %v173 = vstv %s172
    %v174 = vmul.f32 %v37, %v173
    %s175 = sld [smem:[#allocation2 + $0x9]]
    %v176 = vstv %s175
    %v177 = vmul.f32 %v42, %v176
    %v178 = vadd.f32 %v174, %v177
    %s179 = sld [smem:[#allocation2 + $0xf]]
    %v180 = vstv %s179
    %v181 = vmul.f32 %v48, %v180
    %v182 = vadd.f32 %v178, %v181
    %s183 = sld [smem:[#allocation2 + $0x15]]
    %v184 = vstv %s183
    %v185 = vmul.f32 %v54, %v184
    %v186 = vadd.f32 %v182, %v185
    %s187 = sld [smem:[#allocation2 + $0x1b]]
    %v188 = vstv %s187
    %v189 = vmul.f32 %v60, %v188
    %v190 = vadd.f32 %v186, %v189
    %s191 = sld [smem:[#allocation2 + $0x21]]
    %v192 = vstv %s191
    %v193 = vmul.f32 %v66, %v192
    %v194 = vadd.f32 %v190, %v193
    %s195 = sld [smem:[#allocation2 + $0x27]]
    %v196 = vstv %s195
    %v197 = vmul.f32 %v72, %v196
    %v198 = vadd.f32 %v194, %v197
    %s199 = sld [smem:[#allocation2 + $0x2d]]
    %v200 = vstv %s199
    %v201 = vmul.f32 %v78, %v200
    %v202 = vadd.f32 %v198, %v201
    %s203 = sld [smem:[#allocation2 + $0x33]]
    %v204 = vstv %s203
    %v205 = vadd.f32 %v202, %v204
    %v206 = vxor.u32 %v205, 2147483648
    %v207 = vmul.f32 %v206, 1.442695
    %v208 = vpow.pop %v207
    %v209 = vadd.f32 %v208, 1.0
    %v210 = vrcp.pop %v209
    %v211 = vmul.f32 1.0, %v210
    %s212 = sld [smem:[#allocation2 + $0x4]]
    %v213 = vstv %s212
    %v214 = vmul.f32 %v37, %v213
    %s215 = sld [smem:[#allocation2 + $0xa]]
    %v216 = vstv %s215
    %v217 = vmul.f32 %v42, %v216
    %v218 = vadd.f32 %v214, %v217
    %s219 = sld [smem:[#allocation2 + $0x10]]
    %v220 = vstv %s219
    %v221 = vmul.f32 %v48, %v220
    %v222 = vadd.f32 %v218, %v221
    %s223 = sld [smem:[#allocation2 + $0x16]]
    %v224 = vstv %s223
    %v225 = vmul.f32 %v54, %v224
    %v226 = vadd.f32 %v222, %v225
    %s227 = sld [smem:[#allocation2 + $0x1c]]
    %v228 = vstv %s227
    %v229 = vmul.f32 %v60, %v228
    %v230 = vadd.f32 %v226, %v229
    %s231 = sld [smem:[#allocation2 + $0x22]]
    %v232 = vstv %s231
    %v233 = vmul.f32 %v66, %v232
    %v234 = vadd.f32 %v230, %v233
    %s235 = sld [smem:[#allocation2 + $0x28]]
    %v236 = vstv %s235
    %v237 = vmul.f32 %v72, %v236
    %v238 = vadd.f32 %v234, %v237
    %s239 = sld [smem:[#allocation2 + $0x2e]]
    %v240 = vstv %s239
    %v241 = vmul.f32 %v78, %v240
    %v242 = vadd.f32 %v238, %v241
    %s243 = sld [smem:[#allocation2 + $0x34]]
    %v244 = vstv %s243
    %v245 = vadd.f32 %v242, %v244
    %v246 = vxor.u32 %v245, 2147483648
    %v247 = vmul.f32 %v246, 1.442695
    %v248 = vpow.pop %v247
    %v249 = vadd.f32 %v248, 1.0
    %v250 = vrcp.pop %v249
    %v251 = vmul.f32 1.0, %v250
    %s252 = sld [smem:[#allocation2 + $0x5]]
    %v253 = vstv %s252
    %v254 = vmul.f32 %v37, %v253
    %s255 = sld [smem:[#allocation2 + $0xb]]
    %v256 = vstv %s255
    %v257 = vmul.f32 %v42, %v256
    %v258 = vadd.f32 %v254, %v257
    %s259 = sld [smem:[#allocation2 + $0x11]]
    %v260 = vstv %s259
    %v261 = vmul.f32 %v48, %v260
    %v262 = vadd.f32 %v258, %v261
    %s263 = sld [smem:[#allocation2 + $0x17]]
    %v264 = vstv %s263
    %v265 = vmul.f32 %v54, %v264
    %v266 = vadd.f32 %v262, %v265
    %s267 = sld [smem:[#allocation2 + $0x1d]]
    %v268 = vstv %s267
    %v269 = vmul.f32 %v60, %v268
    %v270 = vadd.f32 %v266, %v269
    %s271 = sld [smem:[#allocation2 + $0x23]]
    %v272 = vstv %s271
    %v273 = vmul.f32 %v66, %v272
    %v274 = vadd.f32 %v270, %v273
    %s275 = sld [smem:[#allocation2 + $0x29]]
    %v276 = vstv %s275
    %v277 = vmul.f32 %v72, %v276
    %v278 = vadd.f32 %v274, %v277
    %s279 = sld [smem:[#allocation2 + $0x2f]]
    %v280 = vstv %s279
    %v281 = vmul.f32 %v78, %v280
    %v282 = vadd.f32 %v278, %v281
    %s283 = sld [smem:[#allocation2 + $0x35]]
    %v284 = vstv %s283
    %v285 = vadd.f32 %v282, %v284
    %v286 = vxor.u32 %v285, 2147483648
    %v287 = vmul.f32 %v286, 1.442695
    %v288 = vpow.pop %v287
    %v289 = vadd.f32 %v288, 1.0
    %v290 = vrcp.pop %v289
    %v291 = vmul.f32 1.0, %v290
    %s292 = sld [smem:[#allocation2 + $0x36]]
    %v293 = vstv %s292
    %v294 = vmul.f32 %v91, %v293
    %s295 = sld [smem:[#allocation2 + $0x39]]
    %v296 = vstv %s295
    %v297 = vmul.f32 %v131, %v296
    %v298 = vadd.f32 %v294, %v297
    %s299 = sld [smem:[#allocation2 + $0x3c]]
    %v300 = vstv %s299
    %v301 = vmul.f32 %v171, %v300
    %v302 = vadd.f32 %v298, %v301
    %s303 = sld [smem:[#allocation2 + $0x3f]]
    %v304 = vstv %s303
    %v305 = vmul.f32 %v211, %v304
    %v306 = vadd.f32 %v302, %v305
    %s307 = sld [smem:[#allocation2 + $0x42]]
    %v308 = vstv %s307
    %v309 = vmul.f32 %v251, %v308
    %v310 = vadd.f32 %v306, %v309
    %s311 = sld [smem:[#allocation2 + $0x45]]
    %v312 = vstv %s311
    %v313 = vmul.f32 %v291, %v312
    %v314 = vadd.f32 %v310, %v313
    %s315 = sld [smem:[#allocation2 + $0x48]]
    %v316 = vstv %s315
    %v317 = vadd.f32 %v314, %v316
    %v318 = vxor.u32 %v317, 2147483648
    %v319 = vmul.f32 %v318, 1.442695
    %v320 = vpow.pop %v319
    %v321 = vadd.f32 %v320, 1.0
    %v322 = vrcp.pop %v321
    %v323 = vmul.f32 1.0, %v322
    %s324 = sld [smem:[#allocation2 + $0x37]]
    %v325 = vstv %s324
    %v326 = vmul.f32 %v91, %v325
    %s327 = sld [smem:[#allocation2 + $0x3a]]
    %v328 = vstv %s327
    %v329 = vmul.f32 %v131, %v328
    %v330 = vadd.f32 %v326, %v329
    %s331 = sld [smem:[#allocation2 + $0x3d]]
    %v332 = vstv %s331
    %v333 = vmul.f32 %v171, %v332
    %v334 = vadd.f32 %v330, %v333
    %s335 = sld [smem:[#allocation2 + $0x40]]
    %v336 = vstv %s335
    %v337 = vmul.f32 %v211, %v336
    %v338 = vadd.f32 %v334, %v337
    %s339 = sld [smem:[#allocation2 + $0x43]]
    %v340 = vstv %s339
    %v341 = vmul.f32 %v251, %v340
    %v342 = vadd.f32 %v338, %v341
    %s343 = sld [smem:[#allocation2 + $0x46]]
    %v344 = vstv %s343
    %v345 = vmul.f32 %v291, %v344
    %v346 = vadd.f32 %v342, %v345
    %s347 = sld [smem:[#allocation2 + $0x49]]
    %v348 = vstv %s347
    %v349 = vadd.f32 %v346, %v348
    %v350 = vxor.u32 %v349, 2147483648
    %v351 = vmul.f32 %v350, 1.442695
    %v352 = vpow.pop %v351
    %v353 = vadd.f32 %v352, 1.0
    %v354 = vrcp.pop %v353
    %v355 = vmul.f32 1.0, %v354
    %s356 = sld [smem:[#allocation2 + $0x38]]
    %v357 = vstv %s356
    %v358 = vmul.f32 %v91, %v357
    %s359 = sld [smem:[#allocation2 + $0x3b]]
    %v360 = vstv %s359
    %v361 = vmul.f32 %v131, %v360
    %v362 = vadd.f32 %v358, %v361
    %s363 = sld [smem:[#allocation2 + $0x3e]]
    %v364 = vstv %s363
    %v365 = vmul.f32 %v171, %v364
    %v366 = vadd.f32 %v362, %v365
    %s367 = sld [smem:[#allocation2 + $0x41]]
    %v368 = vstv %s367
    %v369 = vmul.f32 %v211, %v368
    %v370 = vadd.f32 %v366, %v369
    %s371 = sld [smem:[#allocation2 + $0x44]]
    %v372 = vstv %s371
    %v373 = vmul.f32 %v251, %v372
    %v374 = vadd.f32 %v370, %v373
    %s375 = sld [smem:[#allocation2 + $0x47]]
    %v376 = vstv %s375
    %v377 = vmul.f32 %v291, %v376
    %v378 = vadd.f32 %v374, %v377
    %s379 = sld [smem:[#allocation2 + $0x4a]]
    %v380 = vstv %s379
    %v381 = vadd.f32 %v378, %v380
    %v382 = vxor.u32 %v381, 2147483648
    %v383 = vmul.f32 %v382, 1.442695
    %v384 = vpow.pop %v383
    %v385 = vadd.f32 %v384, 1.0
    %v386 = vrcp.pop %v385
    %v387 = vmul.f32 1.0, %v386
    %s388 = sld [smem:[#allocation2 + $0x4b]]
    %v389 = vstv %s388
    %v390 = vmul.f32 %v323, %v389
    %s391 = sld [smem:[#allocation2 + $0x4c]]
    %v392 = vstv %s391
    %v393 = vmul.f32 %v355, %v392
    %v394 = vadd.f32 %v390, %v393
    %s395 = sld [smem:[#allocation2 + $0x4d]]
    %v396 = vstv %s395
    %v397 = vmul.f32 %v387, %v396
    %v398 = vadd.f32 %v394, %v397
    %s399 = sld [smem:[#allocation2 + $0x4e]]
    %v400 = vstv %s399
    %v401 = vadd.f32 %v398, %v400
    %v402 = vxor.u32 %v401, 2147483648
    %v403 = vmul.f32 %v402, 1.442695
    %v404 = vpow.pop %v403
    %v405 = vadd.f32 %v404, 1.0
    %v406 = vrcp.pop %v405
    %v407 = vmul.f32 1.0, %v406
    %408 = vst [vmem:[#allocation7] sm:$0xff] %v407
    // Predicated region
    $region18: #{tpu_custom_call.1} parent=1 // pred_check
      _
    $region19: #{tpu_custom_call.1} parent=1 // pred_check_branch
      %410 = sbr.rel (0) target = $region21
    $region20: #{tpu_custom_call.1} parent=1 // pred_region
      %s412 = ssub.s32 128, 128
      %413 = vsyncadd [#allocation4], %s412
      %s415 = sshll.u32 [#allocation7], 4
      %s416 = int_to_ptr.vmem [resolvable:$true] %s415
      %418 = dma.vmem_to_hbm [thread:$0]  %s416, 128, %s2, [#allocation4]
    $region21: #{tpu_custom_call.1} parent=1 // pred_fallthru
      _
    // Predicated region
    $region22: #{tpu_custom_call.1} parent=1 // pred_check
      _
    $region23: #{tpu_custom_call.1} parent=1 // pred_check_branch
      %420 = sbr.rel (0) target = $region25
    $region24: #{tpu_custom_call.1} parent=1 // pred_region
      %421 = dma.done [#allocation4], 128
    $region25: #{tpu_custom_call.1} parent=1 // pred_fallthru
      _
    %422 = vsyncpa [#allocation3], 1
    %423 = vsyncpa [#allocation4], 1
    %424 = vsyncpa [#allocation5], 1

</llo_original>
